<compile_context>
chip_gen: v5e
topology: v5e:2x2
jax: 0.10.0
libtpu: 0.0.40
codegen_flags: <defaults>
</compile_context>

<pallas_src>
import jax
import jax.numpy as jnp
from jax.experimental import pallas as pl
from jax.experimental.pallas import tpu as pltpu


def _round_up(x, m):
    return ((x + m - 1) // m) * m


def _residual_error_kernel(yq_ref, Y_ref, wencT_ref, wdecT_ref, bias_ref,
                           out_ref, acc_ref):
    """Grid step (i, k): Yq_k = y_q @ WencT[:, k]; acc += (Y_k - Yq_k) @ WdecT[k, :]."""
    k = pl.program_id(1)
    cdt = wencT_ref.dtype

    @pl.when(k == 0)
    def _init():
        acc_ref[...] = jnp.zeros_like(acc_ref)

    # Y_q chunk (tm, tk): plain NN matmul on the pre-transposed encoder weight.
    Yq = jnp.dot(yq_ref[...].astype(cdt), wencT_ref[...],
                 preferred_element_type=jnp.float32)
    # Residual kept in f32 on the VPU (activation fake-quant is Identity).
    Y1 = Y_ref[...].astype(jnp.float32) - Yq
    # Decoder matmul chunk, accumulated in f32.
    acc_ref[...] += jnp.dot(Y1.astype(cdt), wdecT_ref[...],
                            preferred_element_type=jnp.float32)

    @pl.when(k == pl.num_programs(1) - 1)
    def _finalize():
        out_ref[...] = (acc_ref[...] + bias_ref[...]).astype(out_ref.dtype)


def residual_error_block_linear(Y, y_q, w_decoder, w_residual_encoder,
                                decoder_bias, *, compute_dtype=jnp.bfloat16,
                                tm_max=None, tk=None):
    """Pallas implementation of ResidualErrorBlock.forward for a Linear decoder.

    Y:                  (..., d_in)        decoder-input-space activations
    y_q:                (..., d_out)       decoder-output-space activations
    w_decoder:          (d_out, d_in)      PyTorch Linear weight layout
    w_residual_encoder: (d_in, d_out)      PyTorch Linear weight layout
    decoder_bias:       (d_out,)
    compute_dtype:      dtype fed to the two MXU matmuls (default bf16; the
                        accumulation, Y - Y_q and bias math stay f32).  Use
                        jnp.float32 for exact module semantics.
    tm_max / tk:        optional tile overrides (None = auto, generation-aware).
    returns y1:         (..., d_out)
    """
    d_out, d_in = w_decoder.shape
    assert w_residual_encoder.shape == (d_in, d_out)
    assert Y.shape[-1] == d_in and y_q.shape[-1] == d_out
    lead = Y.shape[:-1]
    assert y_q.shape[:-1] == lead

    compute_dtype = jnp.dtype(compute_dtype)
    out_dtype = Y.dtype
    cb = compute_dtype.itemsize
    yb = jnp.dtype(Y.dtype).itemsize
    qb = jnp.dtype(y_q.dtype).itemsize
    ob = jnp.dtype(out_dtype).itemsize

    M = 1
    for s in lead:
        M *= s

    # ---- generation-aware VMEM budget (v5e/v6e: 128 MiB/TC, v7x: 64 MiB/TC) --
    try:
        vmem_cap = int(pltpu.get_tpu_info().vmem_capacity_bytes)
    except Exception:
        vmem_cap = 64 << 20                       # most conservative (v7x)
    vmem_budget = int(0.8 * vmem_cap)             # ~20% headroom for Mosaic scratch

    # ---- tiling --------------------------------------------------------------
    # Sublane packing: 8 rows/vreg f32, 16 bf16, 32 int8/fp8.
    row_mult = max(8, 32 // cb)
    if tm_max is None:
        tm_max = 512 if vmem_cap >= (96 << 20) else 256   # v5e/v6e vs v7x default
    tm = min(int(tm_max), _round_up(M, row_mult))

    # Lane-dense output: pad the output feature dim to a 128 multiple (only
    # when it is not one already) -> unmasked vector stores, full MXU columns.
    d_out_p = _round_up(d_out, 128)

    def vmem_bytes(tm_, tk_, k_tiles_):
        w_bufs = 1 if k_tiles_ == 1 else 2        # resident(single-buf) vs streamed
        return (2 * tm_ * d_out_p * qb            # y_q tiles
                + 2 * tm_ * tk_ * yb              # Y tiles
                + w_bufs * d_out_p * tk_ * cb     # W_enc^T block(s)
                + w_bufs * tk_ * d_out_p * cb     # W_dec^T block(s)
                + 8 * d_out_p * 4                 # bias row (sublane-padded, f32)
                + 2 * tm_ * d_out_p * ob          # output tiles
                + tm_ * d_out_p * 4               # f32 accumulator scratch
                + 2 * tm_ * tk_ * 4)              # f32 Yq / Y1 temporaries

    if tk is None:
        # Prefer fully resident weights; K-tile the d_in reduction only when the
        # resident footprint does not fit the budget (v7x hits this ~2x earlier).
        tk = _round_up(d_in, 128)
        if vmem_bytes(tm, tk, 1) > vmem_budget:
            tk = min(512, tk)
            while tm > 64 and vmem_bytes(tm, tk, 2) > vmem_budget:
                tm = max(64, tm // 2)
    else:
        tk = max(128, (min(int(tk), d_in) // 128) * 128)  # lane-aligned chunk

    k_tiles = int(pl.cdiv(d_in, tk))
    if k_tiles == 1:
        tk = _round_up(d_in, 128)
    d_in_p = k_tiles * tk                                  # 128-multiple
    m_tiles = int(pl.cdiv(M, tm))
    weights_resident = (k_tiles == 1)

    # ---- one-time weight prep (transpose + cast + pad) outside the kernel ----
    wencT = jnp.asarray(w_residual_encoder).T.astype(compute_dtype)   # (d_out, d_in)
    wdecT = jnp.asarray(w_decoder).T.astype(compute_dtype)            # (d_in, d_out)
    bias2 = jnp.asarray(decoder_bias).astype(jnp.float32).reshape(1, d_out)
    if d_in_p != d_in or d_out_p != d_out:
        wencT = jnp.pad(wencT, ((0, d_out_p - d_out), (0, d_in_p - d_in)))
        wdecT = jnp.pad(wdecT, ((0, d_in_p - d_in), (0, d_out_p - d_out)))
    if d_out_p != d_out:
        bias2 = jnp.pad(bias2, ((0, 0), (0, d_out_p - d_out)))

    # Activations: no M padding (partial last block), native dtype (cast to the
    # MXU dtype in-kernel), feature padding only if the dims are not already
    # 128-multiples.
    Y2 = Y.reshape(M, d_in)
    yq2 = y_q.reshape(M, d_out)
    if d_in_p != d_in:
        Y2 = jnp.pad(Y2, ((0, 0), (0, d_in_p - d_in)))
    if d_out_p != d_out:
        yq2 = jnp.pad(yq2, ((0, 0), (0, d_out_p - d_out)))

    est = vmem_bytes(tm, tk, k_tiles)
    vmem_limit_bytes = int(min(vmem_budget, max(2 * est, 32 << 20)))

    # Advisory cost hint for the XLA scheduler around the custom call.
    w_reads = m_tiles if k_tiles > 1 else 1       # streamed weights re-read per M tile
    cost = pl.CostEstimate(
        flops=4 * M * d_in * d_out,
        bytes_accessed=int(Y2.size * yb + yq2.size * qb
                           + w_reads * (wencT.size + wdecT.size) * cb
                           + bias2.size * 4 + M * d_out_p * ob),
        transcendentals=0)

    grid = (m_tiles, k_tiles)

    def run(single_buffer_invariant):
        def spec(shape, index_map, invariant=False):
            if invariant and single_buffer_invariant:
                # Grid-invariant block: one VMEM copy is enough (no pipelining).
                return pl.BlockSpec(shape, index_map, pipeline_mode=pl.Buffered(1))
            return pl.BlockSpec(shape, index_map)

        in_specs = [
            spec((tm, d_out_p), lambda i, k: (i, 0)),                            # y_q
            spec((tm, tk), lambda i, k: (i, k)),                                 # Y
            spec((d_out_p, tk), lambda i, k: (0, k), invariant=weights_resident),  # W_enc^T
            spec((tk, d_out_p), lambda i, k: (k, 0), invariant=weights_resident),  # W_dec^T
            spec((1, d_out_p), lambda i, k: (0, 0), invariant=True),             # bias
        ]
        return pl.pallas_call(
            _residual_error_kernel,
            out_shape=jax.ShapeDtypeStruct((M, d_out_p), out_dtype),
            grid_spec=pltpu.PrefetchScalarGridSpec(
                num_scalar_prefetch=0,
                grid=grid,
                in_specs=in_specs,
                out_specs=pl.BlockSpec((tm, d_out_p), lambda i, k: (i, 0)),
                scratch_shapes=[pltpu.VMEM((tm, d_out_p), jnp.float32)],
            ),
            compiler_params=pltpu.CompilerParams(
                dimension_semantics=("parallel", "arbitrary"),
                vmem_limit_bytes=vmem_limit_bytes,
            ),
            cost_estimate=cost,
        )(yq2, Y2, wencT, wdecT, bias2)

    try:
        y1_flat = run(True)
    except Exception:
        # pipeline_mode=pl.Buffered(1) not available on this JAX version ->
        # identical kernel with default double-buffering (correctness unchanged).
        y1_flat = run(False)

    if d_out_p != d_out:
        y1_flat = y1_flat[:, :d_out]
    return y1_flat.reshape(*lead, d_out)


def _reference(Y, y_q, w_decoder, w_residual_encoder, decoder_bias):
    Yq = jnp.einsum("...o,io->...i", y_q, w_residual_encoder)
    Y1 = Y - Yq
    return jnp.einsum("...i,oi->...o", Y1, w_decoder) + decoder_bias


if __name__ == "__main__":
    key = jax.random.PRNGKey(0)
    k_y, k_yq, k_wd, k_we, k_b = jax.random.split(key, 5)

    # decoder = nn.Linear(in_features=32, out_features=16, bias=True)
    B, S, d_in, d_out = 2, 8, 32, 16
    Y = jax.random.normal(k_y, (B, S, d_in), dtype=jnp.float32)
    y_q = jax.random.normal(k_yq, (B, S, d_out), dtype=jnp.float32)
    w_decoder = 0.1 * jax.random.normal(k_wd, (d_out, d_in), dtype=jnp.float32)
    w_residual_encoder = 0.1 * jax.random.normal(k_we, (d_in, d_out), dtype=jnp.float32)
    decoder_bias = 0.1 * jax.random.normal(k_b, (d_out,), dtype=jnp.float32)

    y1_ref = _reference(Y, y_q, w_decoder, w_residual_encoder, decoder_bias)

    # Exact-f32 module semantics.
    y1_f32 = residual_error_block_linear(
        Y, y_q, w_decoder, w_residual_encoder, decoder_bias,
        compute_dtype=jnp.float32)
    y1_f32 = jax.block_until_ready(y1_f32)
    assert y1_f32.shape == (B, S, d_out)
    assert jnp.allclose(y1_f32, y1_ref, atol=1e-4, rtol=1e-4), "f32 mismatch vs reference"

    # Default bf16-on-MXU fast path (f32 accumulation / residual / bias math).
    y1_bf16 = residual_error_block_linear(
        Y, y_q, w_decoder, w_residual_encoder, decoder_bias)
    y1_bf16 = jax.block_until_ready(y1_bf16)
    assert y1_bf16.shape == (B, S, d_out)
    assert jnp.allclose(y1_bf16, y1_ref, atol=5e-2, rtol=5e-2), "bf16 mismatch vs reference"

    # Exercise the K-tiled (streamed-weight + VMEM accumulator) path by forcing
    # tk < d_in at still-small shapes.
    d_in2, d_out2 = 256, 128
    kk = jax.random.split(jax.random.PRNGKey(1), 5)
    Yb = jax.random.normal(kk[0], (B, S, d_in2), dtype=jnp.float32)
    yqb = jax.random.normal(kk[1], (B, S, d_out2), dtype=jnp.float32)
    wdb = 0.05 * jax.random.normal(kk[2], (d_out2, d_in2), dtype=jnp.float32)
    web = 0.05 * jax.random.normal(kk[3], (d_in2, d_out2), dtype=jnp.float32)
    bb = 0.05 * jax.random.normal(kk[4], (d_out2,), dtype=jnp.float32)
    refb = _reference(Yb, yqb, wdb, web, bb)
    outb = residual_error_block_linear(Yb, yqb, wdb, web, bb,
                                       compute_dtype=jnp.float32, tk=128)
    outb = jax.block_until_ready(outb)
    assert outb.shape == (B, S, d_out2)
    assert jnp.allclose(outb, refb, atol=1e-3, rtol=1e-3), "K-tiled mismatch vs reference"

    print("KERNEL_OK")
</pallas_src>

<mosaic_0001>
module attributes {stable_mosaic.version = 11 : i64} {
  func.func @_residual_error_kernel(%arg0: i32, %arg1: i32, %arg2: memref<16x128xf32, #tpu.memory_space<vmem>>, %arg3: memref<16x128xf32, #tpu.memory_space<vmem>>, %arg4: memref<128x128xf32, #tpu.memory_space<vmem>>, %arg5: memref<128x128xf32, #tpu.memory_space<vmem>>, %arg6: memref<1x128xf32, #tpu.memory_space<vmem>>, %arg7: memref<16x128xf32, #tpu.memory_space<vmem>>, %arg8: memref<16x128xf32, #tpu.memory_space<vmem>>) attributes {dimension_semantics = [#tpu.dimension_semantics<parallel>, #tpu.dimension_semantics<arbitrary>], iteration_bounds = array<i64: 1, 1>, scalar_prefetch = 0 : i64, scratch_operands = 1 : i64, tpu.core_type = #tpu.core_type<tc>, window_params = [{transform_indices = @transform_0, window_bounds = array<i64: 16, 128>}, {transform_indices = @transform_1, window_bounds = array<i64: 16, 128>}, {pipeline_mode = #tpu.pipeline_mode<synchronous>, transform_indices = @transform_2, window_bounds = array<i64: 128, 128>}, {pipeline_mode = #tpu.pipeline_mode<synchronous>, transform_indices = @transform_3, window_bounds = array<i64: 128, 128>}, {pipeline_mode = #tpu.pipeline_mode<synchronous>, transform_indices = @transform_4, window_bounds = array<i64: 1, 128>}, {transform_indices = @transform_5, window_bounds = array<i64: 16, 128>}]} {
    %c0_i32 = arith.constant 0 : i32
    %0 = arith.cmpi eq, %arg1, %c0_i32 : i32
    %1 = arith.extui %0 : i1 to i32
    %c0_i32_0 = arith.constant 0 : i32
    %2 = arith.cmpi ne, %1, %c0_i32_0 : i32
    scf.if %2 {
      %cst_15 = arith.constant 0.000000e+00 : f32
      %16 = vector.broadcast %cst_15 : f32 to vector<16x128xf32>
      %c0_16 = arith.constant 0 : index
      %c0_17 = arith.constant 0 : index
      %17 = vector.load %arg8[%c0_16, %c0_17] : memref<16x128xf32, #tpu.memory_space<vmem>>, vector<16x128xf32>
      tpu.vector_store %arg8[%c0_16, %c0_17], %16 {strides = array<i32>} : memref<16x128xf32, #tpu.memory_space<vmem>>, vector<16x128xf32>,
    } else {
    }
    %c0 = arith.constant 0 : index
    %c0_1 = arith.constant 0 : index
    %3 = vector.load %arg2[%c0, %c0_1] : memref<16x128xf32, #tpu.memory_space<vmem>>, vector<16x128xf32>
    %c0_2 = arith.constant 0 : index
    %c0_3 = arith.constant 0 : index
    %4 = vector.load %arg4[%c0_2, %c0_3] : memref<128x128xf32, #tpu.memory_space<vmem>>, vector<128x128xf32>
    %cst = arith.constant dense<0.000000e+00> : vector<16x128xf32>
    %5 = tpu.matmul %3, %4, %cst {dimension_numbers = #tpu.dot_dimension_numbers<[1], [0], [0], [1], [0, 0, 1, 1], [], []>} : vector<16x128xf32>, vector<128x128xf32>, vector<16x128xf32> -> vector<16x128xf32>
    %c0_4 = arith.constant 0 : index
    %c0_5 = arith.constant 0 : index
    %6 = vector.load %arg3[%c0_4, %c0_5] : memref<16x128xf32, #tpu.memory_space<vmem>>, vector<16x128xf32>
    %7 = arith.subf %6, %5 : vector<16x128xf32>
    %c0_6 = arith.constant 0 : index
    %c0_7 = arith.constant 0 : index
    %8 = vector.load %arg8[%c0_6, %c0_7] : memref<16x128xf32, #tpu.memory_space<vmem>>, vector<16x128xf32>
    %c0_8 = arith.constant 0 : index
    %c0_9 = arith.constant 0 : index
    %9 = vector.load %arg5[%c0_8, %c0_9] : memref<128x128xf32, #tpu.memory_space<vmem>>, vector<128x128xf32>
    %cst_10 = arith.constant dense<0.000000e+00> : vector<16x128xf32>
    %10 = tpu.matmul %7, %9, %cst_10 {dimension_numbers = #tpu.dot_dimension_numbers<[1], [0], [0], [1], [0, 0, 1, 1], [], []>} : vector<16x128xf32>, vector<128x128xf32>, vector<16x128xf32> -> vector<16x128xf32>
    %11 = arith.addf %8, %10 : vector<16x128xf32>
    %c0_11 = arith.constant 0 : index
    %c0_12 = arith.constant 0 : index
    %12 = vector.load %arg8[%c0_11, %c0_12] : memref<16x128xf32, #tpu.memory_space<vmem>>, vector<16x128xf32>
    tpu.vector_store %arg8[%c0_11, %c0_12], %11 {strides = array<i32>} : memref<16x128xf32, #tpu.memory_space<vmem>>, vector<16x128xf32>,
    %c0_i32_13 = arith.constant 0 : i32
    %13 = arith.cmpi eq, %arg1, %c0_i32_13 : i32
    %14 = arith.extui %13 : i1 to i32
    %c0_i32_14 = arith.constant 0 : i32
    %15 = arith.cmpi ne, %14, %c0_i32_14 : i32
    scf.if %15 {
      %c0_15 = arith.constant 0 : index
      %c0_16 = arith.constant 0 : index
      %16 = vector.load %arg8[%c0_15, %c0_16] : memref<16x128xf32, #tpu.memory_space<vmem>>, vector<16x128xf32>
      %c0_17 = arith.constant 0 : index
      %c0_18 = arith.constant 0 : index
      %17 = vector.load %arg6[%c0_17, %c0_18] : memref<1x128xf32, #tpu.memory_space<vmem>>, vector<1x128xf32>
      %18 = vector.broadcast %17 : vector<1x128xf32> to vector<16x128xf32>
      %19 = arith.addf %16, %18 : vector<16x128xf32>
      %c0_19 = arith.constant 0 : index
      %c0_20 = arith.constant 0 : index
      %20 = vector.load %arg7[%c0_19, %c0_20] : memref<16x128xf32, #tpu.memory_space<vmem>>, vector<16x128xf32>
      tpu.vector_store %arg7[%c0_19, %c0_20], %19 {strides = array<i32>} : memref<16x128xf32, #tpu.memory_space<vmem>>, vector<16x128xf32>,
    } else {
    }
    return
  }
  func.func @transform_0(%arg0: i32, %arg1: i32) -> (i32, i32) {
    %c0_i32 = arith.constant 0 : i32
    %c0_i32_0 = arith.constant 0 : i32
    return %arg0, %c0_i32 : i32, i32
  }
  func.func @transform_1(%arg0: i32, %arg1: i32) -> (i32, i32) {
    %c0_i32 = arith.constant 0 : i32
    return %arg0, %arg1 : i32, i32
  }
  func.func @transform_2(%arg0: i32, %arg1: i32) -> (i32, i32) {
    %c0_i32 = arith.constant 0 : i32
    %c0_i32_0 = arith.constant 0 : i32
    return %c0_i32, %arg1 : i32, i32
  }
  func.func @transform_3(%arg0: i32, %arg1: i32) -> (i32, i32) {
    %c0_i32 = arith.constant 0 : i32
    %c0_i32_0 = arith.constant 0 : i32
    return %arg1, %c0_i32 : i32, i32
  }
  func.func @transform_4(%arg0: i32, %arg1: i32) -> (i32, i32) {
    %c0_i32 = arith.constant 0 : i32
    %c0_i32_0 = arith.constant 0 : i32
    %c0_i32_1 = arith.constant 0 : i32
    return %c0_i32, %c0_i32_0 : i32, i32
  }
  func.func @transform_5(%arg0: i32, %arg1: i32) -> (i32, i32) {
    %c0_i32 = arith.constant 0 : i32
    %c0_i32_0 = arith.constant 0 : i32
    return %arg0, %c0_i32 : i32, i32
  }
}

module attributes {stable_mosaic.version = 11 : i64} {
  func.func @_residual_error_kernel(%arg0: i32, %arg1: i32, %arg2: memref<16x128xf32, #tpu.memory_space<vmem>>, %arg3: memref<16x128xf32, #tpu.memory_space<vmem>>, %arg4: memref<128x128xf32, #tpu.memory_space<vmem>>, %arg5: memref<128x128xf32, #tpu.memory_space<vmem>>, %arg6: memref<1x128xf32, #tpu.memory_space<vmem>>, %arg7: memref<16x128xf32, #tpu.memory_space<vmem>>, %arg8: memref<16x128xf32, #tpu.memory_space<vmem>>) attributes {dimension_semantics = [#tpu.dimension_semantics<parallel>, #tpu.dimension_semantics<arbitrary>], iteration_bounds = array<i64: 1, 1>, scalar_prefetch = 0 : i64, scratch_operands = 1 : i64, tpu.core_type = #tpu.core_type<tc>, window_params = [{transform_indices = @transform_0, window_bounds = array<i64: 16, 128>}, {transform_indices = @transform_1, window_bounds = array<i64: 16, 128>}, {transform_indices = @transform_2, window_bounds = array<i64: 128, 128>}, {transform_indices = @transform_3, window_bounds = array<i64: 128, 128>}, {pipeline_mode = #tpu.pipeline_mode<synchronous>, transform_indices = @transform_4, window_bounds = array<i64: 1, 128>}, {transform_indices = @transform_5, window_bounds = array<i64: 16, 128>}]} {
    %c0_i32 = arith.constant 0 : i32
    %0 = arith.cmpi eq, %arg1, %c0_i32 : i32
    %1 = arith.extui %0 : i1 to i32
    %c0_i32_0 = arith.constant 0 : i32
    %2 = arith.cmpi ne, %1, %c0_i32_0 : i32
    scf.if %2 {
      %cst_15 = arith.constant 0.000000e+00 : f32
      %16 = vector.broadcast %cst_15 : f32 to vector<16x128xf32>
      %c0_16 = arith.constant 0 : index
      %c0_17 = arith.constant 0 : index
      %17 = vector.load %arg8[%c0_16, %c0_17] : memref<16x128xf32, #tpu.memory_space<vmem>>, vector<16x128xf32>
      tpu.vector_store %arg8[%c0_16, %c0_17], %16 {strides = array<i32>} : memref<16x128xf32, #tpu.memory_space<vmem>>, vector<16x128xf32>,
    } else {
    }
    %c0 = arith.constant 0 : index
    %c0_1 = arith.constant 0 : index
    %3 = vector.load %arg2[%c0, %c0_1] : memref<16x128xf32, #tpu.memory_space<vmem>>, vector<16x128xf32>
    %c0_2 = arith.constant 0 : index
    %c0_3 = arith.constant 0 : index
    %4 = vector.load %arg4[%c0_2, %c0_3] : memref<128x128xf32, #tpu.memory_space<vmem>>, vector<128x128xf32>
    %cst = arith.constant dense<0.000000e+00> : vector<16x128xf32>
    %5 = tpu.matmul %3, %4, %cst {dimension_numbers = #tpu.dot_dimension_numbers<[1], [0], [0], [1], [0, 0, 1, 1], [], []>} : vector<16x128xf32>, vector<128x128xf32>, vector<16x128xf32> -> vector<16x128xf32>
    %c0_4 = arith.constant 0 : index
    %c0_5 = arith.constant 0 : index
    %6 = vector.load %arg3[%c0_4, %c0_5] : memref<16x128xf32, #tpu.memory_space<vmem>>, vector<16x128xf32>
    %7 = arith.subf %6, %5 : vector<16x128xf32>
    %c0_6 = arith.constant 0 : index
    %c0_7 = arith.constant 0 : index
    %8 = vector.load %arg8[%c0_6, %c0_7] : memref<16x128xf32, #tpu.memory_space<vmem>>, vector<16x128xf32>
    %c0_8 = arith.constant 0 : index
    %c0_9 = arith.constant 0 : index
    %9 = vector.load %arg5[%c0_8, %c0_9] : memref<128x128xf32, #tpu.memory_space<vmem>>, vector<128x128xf32>
    %cst_10 = arith.constant dense<0.000000e+00> : vector<16x128xf32>
    %10 = tpu.matmul %7, %9, %cst_10 {dimension_numbers = #tpu.dot_dimension_numbers<[1], [0], [0], [1], [0, 0, 1, 1], [], []>} : vector<16x128xf32>, vector<128x128xf32>, vector<16x128xf32> -> vector<16x128xf32>
    %11 = arith.addf %8, %10 : vector<16x128xf32>
    %c0_11 = arith.constant 0 : index
    %c0_12 = arith.constant 0 : index
    %12 = vector.load %arg8[%c0_11, %c0_12] : memref<16x128xf32, #tpu.memory_space<vmem>>, vector<16x128xf32>
    tpu.vector_store %arg8[%c0_11, %c0_12], %11 {strides = array<i32>} : memref<16x128xf32, #tpu.memory_space<vmem>>, vector<16x128xf32>,
    %c0_i32_13 = arith.constant 0 : i32
    %13 = arith.cmpi eq, %arg1, %c0_i32_13 : i32
    %14 = arith.extui %13 : i1 to i32
    %c0_i32_14 = arith.constant 0 : i32
    %15 = arith.cmpi ne, %14, %c0_i32_14 : i32
    scf.if %15 {
      %c0_15 = arith.constant 0 : index
      %c0_16 = arith.constant 0 : index
      %16 = vector.load %arg8[%c0_15, %c0_16] : memref<16x128xf32, #tpu.memory_space<vmem>>, vector<16x128xf32>
      %c0_17 = arith.constant 0 : index
      %c0_18 = arith.constant 0 : index
      %17 = vector.load %arg6[%c0_17, %c0_18] : memref<1x128xf32, #tpu.memory_space<vmem>>, vector<1x128xf32>
      %18 = vector.broadcast %17 : vector<1x128xf32> to vector<16x128xf32>
      %19 = arith.addf %16, %18 : vector<16x128xf32>
      %c0_19 = arith.constant 0 : index
      %c0_20 = arith.constant 0 : index
      %20 = vector.load %arg7[%c0_19, %c0_20] : memref<16x128xf32, #tpu.memory_space<vmem>>, vector<16x128xf32>
      tpu.vector_store %arg7[%c0_19, %c0_20], %19 {strides = array<i32>} : memref<16x128xf32, #tpu.memory_space<vmem>>, vector<16x128xf32>,
    } else {
    }
    return
  }
  func.func @transform_0(%arg0: i32, %arg1: i32) -> (i32, i32) {
    %c0_i32 = arith.constant 0 : i32
    %c0_i32_0 = arith.constant 0 : i32
    return %arg0, %c0_i32 : i32, i32
  }
  func.func @transform_1(%arg0: i32, %arg1: i32) -> (i32, i32) {
    %c0_i32 = arith.constant 0 : i32
    return %arg0, %arg1 : i32, i32
  }
  func.func @transform_2(%arg0: i32, %arg1: i32) -> (i32, i32) {
    %c0_i32 = arith.constant 0 : i32
    %c0_i32_0 = arith.constant 0 : i32
    return %c0_i32, %arg1 : i32, i32
  }
  func.func @transform_3(%arg0: i32, %arg1: i32) -> (i32, i32) {
    %c0_i32 = arith.constant 0 : i32
    %c0_i32_0 = arith.constant 0 : i32
    return %arg1, %c0_i32 : i32, i32
  }
  func.func @transform_4(%arg0: i32, %arg1: i32) -> (i32, i32) {
    %c0_i32 = arith.constant 0 : i32
    %c0_i32_0 = arith.constant 0 : i32
    %c0_i32_1 = arith.constant 0 : i32
    return %c0_i32, %c0_i32_0 : i32, i32
  }
  func.func @transform_5(%arg0: i32, %arg1: i32) -> (i32, i32) {
    %c0_i32 = arith.constant 0 : i32
    %c0_i32_0 = arith.constant 0 : i32
    return %arg0, %c0_i32 : i32, i32
  }
}

</mosaic_0001>

<llo_original>
// kernel: tpu_custom_call.1
$region0: #{tpu_custom_call.1}
  #allocation0 [shape = 'u32[]', space=smem, size = 0x4, offset = 0x4, fixed_abs, tag = 'smem constant byte address 0x4 - core index']
  #allocation1 [shape = 'u32[72,128]{1,0:T(1,128)}', space=vmem, size = 0x9000, scoped, tag = 'internal scratch']
  #allocation2 [shape = 'f32[16,128]{1,0:T(8,128)}', space=vmem, size = 0x2000, scoped, tag = 'scratch operand']
  %s0 = inlined_call_operand.hbm [shape: f32[16,128], index: 0, kind: input, shape index: {}]
  %s1 = inlined_call_operand.hbm [shape: f32[16,128], index: 1, kind: input, shape index: {}]
  %s2 = inlined_call_operand.hbm [shape: f32[128,128], index: 2, kind: input, shape index: {}]
  %s3 = inlined_call_operand.hbm [shape: f32[128,128], index: 3, kind: input, shape index: {}]
  %s4 = inlined_call_operand.vmem [shape: f32[1,128], index: 4, kind: input, shape index: {}]
  %s5 = inlined_call_operand.hbm [shape: f32[16,128], index: 5, kind: output, shape index: {}]
  %s6 = sld [smem:[#allocation0]]
  $region54: #{tpu_custom_call.1} parent=0
    _
  %s8 = ssub.s32 1, %s6
  %s9 = scalar_select 0, %s8, %s6
  $region1: #{tpu_custom_call.1} parent=0
    #allocation3 [shape = 'u8[8192]{0}', space=vmem, size = 0x2000, scoped, tag = 'input window, operand 0, single buffered']
    #allocation4 [shape = 's32[1]{0}', space=sflag, size = 0x4, scoped, tag = 'scoped memory for tpu_custom_call.1']
    #allocation5 [shape = 's32[1]{0}', space=sflag, size = 0x4, scoped, tag = 'scoped memory for tpu_custom_call.1']
    #allocation6 [shape = 'u8[8192]{0}', space=vmem, size = 0x2000, scoped, tag = 'input window, operand 1, single buffered']
    #allocation7 [shape = 's32[1]{0}', space=sflag, size = 0x4, scoped, tag = 'scoped memory for tpu_custom_call.1']
    #allocation8 [shape = 'u8[65536]{0}', space=vmem, size = 0x10000, scoped, tag = 'input window, operand 2, single buffered']
    #allocation9 [shape = 'u8[65536]{0}', space=vmem, size = 0x10000, scoped, tag = 'input window, operand 3, single buffered']
    #allocation10 [shape = 's32[1]{0}', space=sflag, size = 0x4, scoped, tag = 'scoped memory for tpu_custom_call.1']
    #allocation11 [shape = 'u8[8192]{0}', space=vmem, size = 0x2000, scoped, tag = 'output window, operand 0, single buffered']
    %10 = vsyncpa [#allocation4], 0
    %11 = vsyncpa [#allocation7], 0
    %12 = vsyncpa [#allocation10], 0
    %13 = vsyncpa [#allocation5], 0
    // Predicated region
    $region2: #{tpu_custom_call.1} parent=1 // pred_check
      _
    $region3: #{tpu_custom_call.1} parent=1 // pred_check_branch
      %15 = sbr.rel (0) target = $region5
    $region4: #{tpu_custom_call.1} parent=1 // pred_region
      %17 = vsyncadd [#allocation4], 0
      %s18 = sshll.u32 %s0, 4
      %s19 = int_to_ptr.hbm [resolvable:$true] %s18
      %s20 = sshll.u32 [#allocation3], 4
      %s21 = int_to_ptr.vmem [resolvable:$true] %s20
      %26 = dma.hbm_to_vmem [thread:$0]  %s19, 256, %s21, [#allocation4], 128, 128, 8
    $region5: #{tpu_custom_call.1} parent=1 // pred_fallthru
      _
    // Predicated region
    $region6: #{tpu_custom_call.1} parent=1 // pred_check
      _
    $region7: #{tpu_custom_call.1} parent=1 // pred_check_branch
      %28 = sbr.rel (0) target = $region9
    $region8: #{tpu_custom_call.1} parent=1 // pred_region
      %30 = vsyncadd [#allocation7], 0
      %s31 = sshll.u32 %s1, 4
      %s32 = int_to_ptr.hbm [resolvable:$true] %s31
      %s33 = sshll.u32 [#allocation6], 4
      %s34 = int_to_ptr.vmem [resolvable:$true] %s33
      %39 = dma.hbm_to_vmem [thread:$0]  %s32, 256, %s34, [#allocation7], 128, 128, 8
    $region9: #{tpu_custom_call.1} parent=1 // pred_fallthru
      _
    // Predicated region
    $region10: #{tpu_custom_call.1} parent=1 // pred_check
      _
    $region11: #{tpu_custom_call.1} parent=1 // pred_check_branch
      %41 = sbr.rel (0) target = $region13
    $region12: #{tpu_custom_call.1} parent=1 // pred_region
      %43 = vsyncadd [#allocation7], 0
      %s44 = sshll.u32 %s2, 4
      %s45 = int_to_ptr.hbm [resolvable:$true] %s44
      %s46 = sshll.u32 [#allocation8], 4
      %s47 = int_to_ptr.vmem [resolvable:$true] %s46
      %52 = dma.hbm_to_vmem [thread:$0]  %s45, 2048, %s47, [#allocation7], 128, 128, 8
    $region13: #{tpu_custom_call.1} parent=1 // pred_fallthru
      _
    // Predicated region
    $region14: #{tpu_custom_call.1} parent=1 // pred_check
      _
    $region15: #{tpu_custom_call.1} parent=1 // pred_check_branch
      %54 = sbr.rel (0) target = $region17
    $region16: #{tpu_custom_call.1} parent=1 // pred_region
      %56 = vsyncadd [#allocation10], 0
      %s57 = sshll.u32 %s3, 4
      %s58 = int_to_ptr.hbm [resolvable:$true] %s57
      %s59 = sshll.u32 [#allocation9], 4
      %s60 = int_to_ptr.vmem [resolvable:$true] %s59
      %65 = dma.hbm_to_vmem [thread:$0]  %s58, 2048, %s60, [#allocation10], 128, 128, 8
    $region17: #{tpu_custom_call.1} parent=1 // pred_fallthru
      _
    // Predicated region
    $region18: #{tpu_custom_call.1} parent=1 // pred_check
      _
    $region19: #{tpu_custom_call.1} parent=1 // pred_check_branch
      %67 = sbr.rel (0) target = $region21
    $region20: #{tpu_custom_call.1} parent=1 // pred_region
      _
    $region21: #{tpu_custom_call.1} parent=1 // pred_fallthru
      _
    // Predicated region
    $region22: #{tpu_custom_call.1} parent=1 // pred_check
      _
    $region23: #{tpu_custom_call.1} parent=1 // pred_check_branch
      %69 = sbr.rel (0) target = $region25
    $region24: #{tpu_custom_call.1} parent=1 // pred_region
      %71 = dma.done [#allocation4], 256
    $region25: #{tpu_custom_call.1} parent=1 // pred_fallthru
      _
    // Predicated region
    $region26: #{tpu_custom_call.1} parent=1 // pred_check
      _
    $region27: #{tpu_custom_call.1} parent=1 // pred_check_branch
      %73 = sbr.rel (0) target = $region29
    $region28: #{tpu_custom_call.1} parent=1 // pred_region
      %75 = dma.done [#allocation7], 256
    $region29: #{tpu_custom_call.1} parent=1 // pred_fallthru
      _
    // Predicated region
    $region30: #{tpu_custom_call.1} parent=1 // pred_check
      _
    $region31: #{tpu_custom_call.1} parent=1 // pred_check_branch
      %77 = sbr.rel (0) target = $region33
    $region32: #{tpu_custom_call.1} parent=1 // pred_region
      %79 = dma.done [#allocation7], 2048
    $region33: #{tpu_custom_call.1} parent=1 // pred_fallthru
      _
    // Predicated region
    $region34: #{tpu_custom_call.1} parent=1 // pred_check
      _
    $region35: #{tpu_custom_call.1} parent=1 // pred_check_branch
      %81 = sbr.rel (0) target = $region37
    $region36: #{tpu_custom_call.1} parent=1 // pred_region
      %83 = dma.done [#allocation10], 2048
    $region37: #{tpu_custom_call.1} parent=1 // pred_fallthru
      _
    %p84 = scmp.eq.s32.totalorder 0, 0
    // Predicated region
    $region38: #{tpu_custom_call.1} parent=1 // pred_check
      %p85 = pneg %p84
    $region39: #{tpu_custom_call.1} parent=1 // pred_check_branch
      %87 = sbr.rel (%p85) target = $region41
    $region40: #{tpu_custom_call.1} parent=1 // pred_region
      %88 = vst [vmem:[#allocation2] sm:$0xff] 0.0
      %89 = vst [vmem:[#allocation2 + $0x8] sm:$0xff] 0.0
    $region41: #{tpu_custom_call.1} parent=1 // pred_fallthru
      _
    %v90 = vld [vmem:[#allocation3] sm:$0xff]
    %v91 = vld [vmem:[#allocation3 + $0x8] sm:$0xff]
    %v92 = vld [vmem:[#allocation8] sm:$0xff]
    %v93 = vld [vmem:[#allocation8 + $0x8] sm:$0xff]
    %v94 = vld [vmem:[#allocation8 + $0x10] sm:$0xff]
    %v95 = vld [vmem:[#allocation8 + $0x18] sm:$0xff]
    %v96 = vld [vmem:[#allocation8 + $0x20] sm:$0xff]
    %v97 = vld [vmem:[#allocation8 + $0x28] sm:$0xff]
    %v98 = vld [vmem:[#allocation8 + $0x30] sm:$0xff]
    %v99 = vld [vmem:[#allocation8 + $0x38] sm:$0xff]
    %v100 = vld [vmem:[#allocation8 + $0x40] sm:$0xff]
    %v101 = vld [vmem:[#allocation8 + $0x48] sm:$0xff]
    %v102 = vld [vmem:[#allocation8 + $0x50] sm:$0xff]
    %v103 = vld [vmem:[#allocation8 + $0x58] sm:$0xff]
    %v104 = vld [vmem:[#allocation8 + $0x60] sm:$0xff]
    %v105 = vld [vmem:[#allocation8 + $0x68] sm:$0xff]
    %v106 = vld [vmem:[#allocation8 + $0x70] sm:$0xff]
    %v107 = vld [vmem:[#allocation8 + $0x78] sm:$0xff]
    %108 = vmatpush.msra.mxu0 %v107
    %109 = vmatpush.msra.mxu0 %v106
    %110 = vmatpush.msra.mxu0 %v105
    %111 = vmatpush.msra.mxu0 %v104
    %112 = vmatpush.msra.mxu0 %v103
    %113 = vmatpush.msra.mxu0 %v102
    %114 = vmatpush.msra.mxu0 %v101
    %115 = vmatpush.msra.mxu0 %v100
    %116 = vmatpush.msra.mxu0 %v99
    %117 = vmatpush.msra.mxu0 %v98
    %118 = vmatpush.msra.mxu0 %v97
    %119 = vmatpush.msra.mxu0 %v96
    %120 = vmatpush.msra.mxu0 %v95
    %121 = vmatpush.msra.mxu0 %v94
    %122 = vmatpush.msra.mxu0 %v93
    %123 = vmatpush.msra.mxu0 %v92
    %124 = vmatmul.f32.gmra.mxu0 %v90
    %v125 = vpop.f32.mrf.mxu0
    %v126 = vadd.f32 0.0, %v125
    %127 = vmatmul.f32.gmra.mxu0 %v91
    %v128 = vpop.f32.mrf.mxu0
    %v129 = vadd.f32 0.0, %v128
    %130 = vdwg.mxu0
    %v131 = vld [vmem:[#allocation6] sm:$0xff]
    %v132 = vld [vmem:[#allocation6 + $0x8] sm:$0xff]
    %v133 = vsub.f32 %v131, %v126
    %v134 = vsub.f32 %v132, %v129
    %v135 = vld [vmem:[#allocation2] sm:$0xff]
    %v136 = vld [vmem:[#allocation2 + $0x8] sm:$0xff]
    %v137 = vld [vmem:[#allocation9] sm:$0xff]
    %v138 = vld [vmem:[#allocation9 + $0x8] sm:$0xff]
    %v139 = vld [vmem:[#allocation9 + $0x10] sm:$0xff]
    %v140 = vld [vmem:[#allocation9 + $0x18] sm:$0xff]
    %v141 = vld [vmem:[#allocation9 + $0x20] sm:$0xff]
    %v142 = vld [vmem:[#allocation9 + $0x28] sm:$0xff]
    %v143 = vld [vmem:[#allocation9 + $0x30] sm:$0xff]
    %v144 = vld [vmem:[#allocation9 + $0x38] sm:$0xff]
    %v145 = vld [vmem:[#allocation9 + $0x40] sm:$0xff]
    %v146 = vld [vmem:[#allocation9 + $0x48] sm:$0xff]
    %v147 = vld [vmem:[#allocation9 + $0x50] sm:$0xff]
    %v148 = vld [vmem:[#allocation9 + $0x58] sm:$0xff]
    %v149 = vld [vmem:[#allocation9 + $0x60] sm:$0xff]
    %v150 = vld [vmem:[#allocation9 + $0x68] sm:$0xff]
    %v151 = vld [vmem:[#allocation9 + $0x70] sm:$0xff]
    %v152 = vld [vmem:[#allocation9 + $0x78] sm:$0xff]
    %153 = vmatpush.msra.mxu0 %v152
    %154 = vmatpush.msra.mxu0 %v151
    %155 = vmatpush.msra.mxu0 %v150
    %156 = vmatpush.msra.mxu0 %v149
    %157 = vmatpush.msra.mxu0 %v148
    %158 = vmatpush.msra.mxu0 %v147
    %159 = vmatpush.msra.mxu0 %v146
    %160 = vmatpush.msra.mxu0 %v145
    %161 = vmatpush.msra.mxu0 %v144
    %162 = vmatpush.msra.mxu0 %v143
    %163 = vmatpush.msra.mxu0 %v142
    %164 = vmatpush.msra.mxu0 %v141
    %165 = vmatpush.msra.mxu0 %v140
    %166 = vmatpush.msra.mxu0 %v139
    %167 = vmatpush.msra.mxu0 %v138
    %168 = vmatpush.msra.mxu0 %v137
    %169 = vmatmul.f32.gmra.mxu0 %v133
    %v170 = vpop.f32.mrf.mxu0
    %v171 = vadd.f32 0.0, %v170
    %172 = vmatmul.f32.gmra.mxu0 %v134
    %v173 = vpop.f32.mrf.mxu0
    %v174 = vadd.f32 0.0, %v173
    %175 = vdwg.mxu0
    %v176 = vadd.f32 %v135, %v171
    %v177 = vadd.f32 %v136, %v174
    %178 = vst [vmem:[#allocation2] sm:$0xff] %v176
    %179 = vst [vmem:[#allocation2 + $0x8] sm:$0xff] %v177
    // Predicated region
    $region42: #{tpu_custom_call.1} parent=1 // pred_check
      %p180 = pneg %p84
    $region43: #{tpu_custom_call.1} parent=1 // pred_check_branch
      %182 = sbr.rel (%p180) target = $region45
    $region44: #{tpu_custom_call.1} parent=1 // pred_region
      %v183 = vld [vmem:[#allocation2] sm:$0xff]
      %v184 = vld [vmem:[#allocation2 + $0x8] sm:$0xff]
      %v185 = vld [vmem:[%s4] sm:$0x1]
      %v187 = vperm.slane %v185, 0
      %v189 = vadd.f32 %v183, %v187
      %v190 = vadd.f32 %v184, %v187
      %191 = vst [vmem:[#allocation11] sm:$0xff] %v189
      %192 = vst [vmem:[#allocation11 + $0x8] sm:$0xff] %v190
    $region45: #{tpu_custom_call.1} parent=1 // pred_fallthru
      _
    // Predicated region
    $region46: #{tpu_custom_call.1} parent=1 // pred_check
      _
    $region47: #{tpu_custom_call.1} parent=1 // pred_check_branch
      %194 = sbr.rel (0) target = $region49
    $region48: #{tpu_custom_call.1} parent=1 // pred_region
      %196 = vsyncadd [#allocation5], 0
      %s197 = sshll.u32 [#allocation11], 4
      %s198 = int_to_ptr.vmem [resolvable:$true] %s197
      %s199 = sshll.u32 %s5, 4
      %s200 = int_to_ptr.hbm [resolvable:$true] %s199
      %205 = dma.vmem_to_hbm [thread:$0]  %s198, 256, %s200, [#allocation5], 128, 128, 8
    $region49: #{tpu_custom_call.1} parent=1 // pred_fallthru
      _
    // Predicated region
    $region50: #{tpu_custom_call.1} parent=1 // pred_check
      _
    $region51: #{tpu_custom_call.1} parent=1 // pred_check_branch
      %207 = sbr.rel (0) target = $region53
    $region52: #{tpu_custom_call.1} parent=1 // pred_region
      %209 = dma.done [#allocation5], 256
    $region53: #{tpu_custom_call.1} parent=1 // pred_fallthru
      _
    %210 = vsyncpa [#allocation4], 1
    %211 = vsyncpa [#allocation7], 1
    %212 = vsyncpa [#allocation10], 1
    %213 = vsyncpa [#allocation5], 1

// kernel: tpu_custom_call.1
$region0: #{tpu_custom_call.1}
  #allocation0 [shape = 'u32[]', space=smem, size = 0x4, offset = 0x4, fixed_abs, tag = 'smem constant byte address 0x4 - core index']
  #allocation1 [shape = 'u32[72,128]{1,0:T(1,128)}', space=vmem, size = 0x9000, scoped, tag = 'internal scratch']
  #allocation2 [shape = 'f32[16,128]{1,0:T(8,128)}', space=vmem, size = 0x2000, scoped, tag = 'scratch operand']
  %s0 = inlined_call_operand.hbm [shape: f32[16,128], index: 0, kind: input, shape index: {}]
  %s1 = inlined_call_operand.hbm [shape: f32[16,128], index: 1, kind: input, shape index: {}]
  %s2 = inlined_call_operand.hbm [shape: f32[128,128], index: 2, kind: input, shape index: {}]
  %s3 = inlined_call_operand.hbm [shape: f32[128,128], index: 3, kind: input, shape index: {}]
  %s4 = inlined_call_operand.vmem [shape: f32[1,128], index: 4, kind: input, shape index: {}]
  %s5 = inlined_call_operand.hbm [shape: f32[16,128], index: 5, kind: output, shape index: {}]
  %s6 = sld [smem:[#allocation0]]
  $region54: #{tpu_custom_call.1} parent=0
    _
  %s8 = ssub.s32 1, %s6
  %s9 = scalar_select 0, %s8, %s6
  $region1: #{tpu_custom_call.1} parent=0
    #allocation3 [shape = 'u8[8192]{0}', space=vmem, size = 0x2000, scoped, tag = 'input window, operand 0, single buffered']
    #allocation4 [shape = 's32[1]{0}', space=sflag, size = 0x4, scoped, tag = 'scoped memory for tpu_custom_call.1']
    #allocation5 [shape = 's32[1]{0}', space=sflag, size = 0x4, scoped, tag = 'scoped memory for tpu_custom_call.1']
    #allocation6 [shape = 'u8[8192]{0}', space=vmem, size = 0x2000, scoped, tag = 'input window, operand 1, single buffered']
    #allocation7 [shape = 's32[1]{0}', space=sflag, size = 0x4, scoped, tag = 'scoped memory for tpu_custom_call.1']
    #allocation8 [shape = 'u8[65536]{0}', space=vmem, size = 0x10000, scoped, tag = 'input window, operand 2, single buffered']
    #allocation9 [shape = 'u8[65536]{0}', space=vmem, size = 0x10000, scoped, tag = 'input window, operand 3, single buffered']
    #allocation10 [shape = 's32[1]{0}', space=sflag, size = 0x4, scoped, tag = 'scoped memory for tpu_custom_call.1']
    #allocation11 [shape = 'u8[8192]{0}', space=vmem, size = 0x2000, scoped, tag = 'output window, operand 0, single buffered']
    %10 = vsyncpa [#allocation4], 0
    %11 = vsyncpa [#allocation7], 0
    %12 = vsyncpa [#allocation10], 0
    %13 = vsyncpa [#allocation5], 0
    // Predicated region
    $region2: #{tpu_custom_call.1} parent=1 // pred_check
      _
    $region3: #{tpu_custom_call.1} parent=1 // pred_check_branch
      %15 = sbr.rel (0) target = $region5
    $region4: #{tpu_custom_call.1} parent=1 // pred_region
      %17 = vsyncadd [#allocation4], 0
      %s18 = sshll.u32 %s0, 4
      %s19 = int_to_ptr.hbm [resolvable:$true] %s18
      %s20 = sshll.u32 [#allocation3], 4
      %s21 = int_to_ptr.vmem [resolvable:$true] %s20
      %26 = dma.hbm_to_vmem [thread:$0]  %s19, 256, %s21, [#allocation4], 128, 128, 8
    $region5: #{tpu_custom_call.1} parent=1 // pred_fallthru
      _
    // Predicated region
    $region6: #{tpu_custom_call.1} parent=1 // pred_check
      _
    $region7: #{tpu_custom_call.1} parent=1 // pred_check_branch
      %28 = sbr.rel (0) target = $region9
    $region8: #{tpu_custom_call.1} parent=1 // pred_region
      %30 = vsyncadd [#allocation7], 0
      %s31 = sshll.u32 %s1, 4
      %s32 = int_to_ptr.hbm [resolvable:$true] %s31
      %s33 = sshll.u32 [#allocation6], 4
      %s34 = int_to_ptr.vmem [resolvable:$true] %s33
      %39 = dma.hbm_to_vmem [thread:$0]  %s32, 256, %s34, [#allocation7], 128, 128, 8
    $region9: #{tpu_custom_call.1} parent=1 // pred_fallthru
      _
    // Predicated region
    $region10: #{tpu_custom_call.1} parent=1 // pred_check
      _
    $region11: #{tpu_custom_call.1} parent=1 // pred_check_branch
      %41 = sbr.rel (0) target = $region13
    $region12: #{tpu_custom_call.1} parent=1 // pred_region
      %43 = vsyncadd [#allocation7], 0
      %s44 = sshll.u32 %s2, 4
      %s45 = int_to_ptr.hbm [resolvable:$true] %s44
      %s46 = sshll.u32 [#allocation8], 4
      %s47 = int_to_ptr.vmem [resolvable:$true] %s46
      %52 = dma.hbm_to_vmem [thread:$0]  %s45, 2048, %s47, [#allocation7], 128, 128, 8
    $region13: #{tpu_custom_call.1} parent=1 // pred_fallthru
      _
    // Predicated region
    $region14: #{tpu_custom_call.1} parent=1 // pred_check
      _
    $region15: #{tpu_custom_call.1} parent=1 // pred_check_branch
      %54 = sbr.rel (0) target = $region17
    $region16: #{tpu_custom_call.1} parent=1 // pred_region
      %56 = vsyncadd [#allocation10], 0
      %s57 = sshll.u32 %s3, 4
      %s58 = int_to_ptr.hbm [resolvable:$true] %s57
      %s59 = sshll.u32 [#allocation9], 4
      %s60 = int_to_ptr.vmem [resolvable:$true] %s59
      %65 = dma.hbm_to_vmem [thread:$0]  %s58, 2048, %s60, [#allocation10], 128, 128, 8
    $region17: #{tpu_custom_call.1} parent=1 // pred_fallthru
      _
    // Predicated region
    $region18: #{tpu_custom_call.1} parent=1 // pred_check
      _
    $region19: #{tpu_custom_call.1} parent=1 // pred_check_branch
      %67 = sbr.rel (0) target = $region21
    $region20: #{tpu_custom_call.1} parent=1 // pred_region
      _
    $region21: #{tpu_custom_call.1} parent=1 // pred_fallthru
      _
    // Predicated region
    $region22: #{tpu_custom_call.1} parent=1 // pred_check
      _
    $region23: #{tpu_custom_call.1} parent=1 // pred_check_branch
      %69 = sbr.rel (0) target = $region25
    $region24: #{tpu_custom_call.1} parent=1 // pred_region
      %71 = dma.done [#allocation4], 256
    $region25: #{tpu_custom_call.1} parent=1 // pred_fallthru
      _
    // Predicated region
    $region26: #{tpu_custom_call.1} parent=1 // pred_check
      _
    $region27: #{tpu_custom_call.1} parent=1 // pred_check_branch
      %73 = sbr.rel (0) target = $region29
    $region28: #{tpu_custom_call.1} parent=1 // pred_region
      %75 = dma.done [#allocation7], 256
    $region29: #{tpu_custom_call.1} parent=1 // pred_fallthru
      _
    // Predicated region
    $region30: #{tpu_custom_call.1} parent=1 // pred_check
      _
    $region31: #{tpu_custom_call.1} parent=1 // pred_check_branch
      %77 = sbr.rel (0) target = $region33
    $region32: #{tpu_custom_call.1} parent=1 // pred_region
      %79 = dma.done [#allocation7], 2048
    $region33: #{tpu_custom_call.1} parent=1 // pred_fallthru
      _
    // Predicated region
    $region34: #{tpu_custom_call.1} parent=1 // pred_check
      _
    $region35: #{tpu_custom_call.1} parent=1 // pred_check_branch
      %81 = sbr.rel (0) target = $region37
    $region36: #{tpu_custom_call.1} parent=1 // pred_region
      %83 = dma.done [#allocation10], 2048
    $region37: #{tpu_custom_call.1} parent=1 // pred_fallthru
      _
    %p84 = scmp.eq.s32.totalorder 0, 0
    // Predicated region
    $region38: #{tpu_custom_call.1} parent=1 // pred_check
      %p85 = pneg %p84
    $region39: #{tpu_custom_call.1} parent=1 // pred_check_branch
      %87 = sbr.rel (%p85) target = $region41
    $region40: #{tpu_custom_call.1} parent=1 // pred_region
      %88 = vst [vmem:[#allocation2] sm:$0xff] 0.0
      %89 = vst [vmem:[#allocation2 + $0x8] sm:$0xff] 0.0
    $region41: #{tpu_custom_call.1} parent=1 // pred_fallthru
      _
    %v90 = vld [vmem:[#allocation3] sm:$0xff]
    %v91 = vld [vmem:[#allocation3 + $0x8] sm:$0xff]
    %v92 = vld [vmem:[#allocation8] sm:$0xff]
    %v93 = vld [vmem:[#allocation8 + $0x8] sm:$0xff]
    %v94 = vld [vmem:[#allocation8 + $0x10] sm:$0xff]
    %v95 = vld [vmem:[#allocation8 + $0x18] sm:$0xff]
    %v96 = vld [vmem:[#allocation8 + $0x20] sm:$0xff]
    %v97 = vld [vmem:[#allocation8 + $0x28] sm:$0xff]
    %v98 = vld [vmem:[#allocation8 + $0x30] sm:$0xff]
    %v99 = vld [vmem:[#allocation8 + $0x38] sm:$0xff]
    %v100 = vld [vmem:[#allocation8 + $0x40] sm:$0xff]
    %v101 = vld [vmem:[#allocation8 + $0x48] sm:$0xff]
    %v102 = vld [vmem:[#allocation8 + $0x50] sm:$0xff]
    %v103 = vld [vmem:[#allocation8 + $0x58] sm:$0xff]
    %v104 = vld [vmem:[#allocation8 + $0x60] sm:$0xff]
    %v105 = vld [vmem:[#allocation8 + $0x68] sm:$0xff]
    %v106 = vld [vmem:[#allocation8 + $0x70] sm:$0xff]
    %v107 = vld [vmem:[#allocation8 + $0x78] sm:$0xff]
    %108 = vmatpush.msra.mxu0 %v107
    %109 = vmatpush.msra.mxu0 %v106
    %110 = vmatpush.msra.mxu0 %v105
    %111 = vmatpush.msra.mxu0 %v104
    %112 = vmatpush.msra.mxu0 %v103
    %113 = vmatpush.msra.mxu0 %v102
    %114 = vmatpush.msra.mxu0 %v101
    %115 = vmatpush.msra.mxu0 %v100
    %116 = vmatpush.msra.mxu0 %v99
    %117 = vmatpush.msra.mxu0 %v98
    %118 = vmatpush.msra.mxu0 %v97
    %119 = vmatpush.msra.mxu0 %v96
    %120 = vmatpush.msra.mxu0 %v95
    %121 = vmatpush.msra.mxu0 %v94
    %122 = vmatpush.msra.mxu0 %v93
    %123 = vmatpush.msra.mxu0 %v92
    %124 = vmatmul.f32.gmra.mxu0 %v90
    %v125 = vpop.f32.mrf.mxu0
    %v126 = vadd.f32 0.0, %v125
    %127 = vmatmul.f32.gmra.mxu0 %v91
    %v128 = vpop.f32.mrf.mxu0
    %v129 = vadd.f32 0.0, %v128
    %130 = vdwg.mxu0
    %v131 = vld [vmem:[#allocation6] sm:$0xff]
    %v132 = vld [vmem:[#allocation6 + $0x8] sm:$0xff]
    %v133 = vsub.f32 %v131, %v126
    %v134 = vsub.f32 %v132, %v129
    %v135 = vld [vmem:[#allocation2] sm:$0xff]
    %v136 = vld [vmem:[#allocation2 + $0x8] sm:$0xff]
    %v137 = vld [vmem:[#allocation9] sm:$0xff]
    %v138 = vld [vmem:[#allocation9 + $0x8] sm:$0xff]
    %v139 = vld [vmem:[#allocation9 + $0x10] sm:$0xff]
    %v140 = vld [vmem:[#allocation9 + $0x18] sm:$0xff]
    %v141 = vld [vmem:[#allocation9 + $0x20] sm:$0xff]
    %v142 = vld [vmem:[#allocation9 + $0x28] sm:$0xff]
    %v143 = vld [vmem:[#allocation9 + $0x30] sm:$0xff]
    %v144 = vld [vmem:[#allocation9 + $0x38] sm:$0xff]
    %v145 = vld [vmem:[#allocation9 + $0x40] sm:$0xff]
    %v146 = vld [vmem:[#allocation9 + $0x48] sm:$0xff]
    %v147 = vld [vmem:[#allocation9 + $0x50] sm:$0xff]
    %v148 = vld [vmem:[#allocation9 + $0x58] sm:$0xff]
    %v149 = vld [vmem:[#allocation9 + $0x60] sm:$0xff]
    %v150 = vld [vmem:[#allocation9 + $0x68] sm:$0xff]
    %v151 = vld [vmem:[#allocation9 + $0x70] sm:$0xff]
    %v152 = vld [vmem:[#allocation9 + $0x78] sm:$0xff]
    %153 = vmatpush.msra.mxu0 %v152
    %154 = vmatpush.msra.mxu0 %v151
    %155 = vmatpush.msra.mxu0 %v150
    %156 = vmatpush.msra.mxu0 %v149
    %157 = vmatpush.msra.mxu0 %v148
    %158 = vmatpush.msra.mxu0 %v147
    %159 = vmatpush.msra.mxu0 %v146
    %160 = vmatpush.msra.mxu0 %v145
    %161 = vmatpush.msra.mxu0 %v144
    %162 = vmatpush.msra.mxu0 %v143
    %163 = vmatpush.msra.mxu0 %v142
    %164 = vmatpush.msra.mxu0 %v141
    %165 = vmatpush.msra.mxu0 %v140
    %166 = vmatpush.msra.mxu0 %v139
    %167 = vmatpush.msra.mxu0 %v138
    %168 = vmatpush.msra.mxu0 %v137
    %169 = vmatmul.f32.gmra.mxu0 %v133
    %v170 = vpop.f32.mrf.mxu0
    %v171 = vadd.f32 0.0, %v170
    %172 = vmatmul.f32.gmra.mxu0 %v134
    %v173 = vpop.f32.mrf.mxu0
    %v174 = vadd.f32 0.0, %v173
    %175 = vdwg.mxu0
    %v176 = vadd.f32 %v135, %v171
    %v177 = vadd.f32 %v136, %v174
    %178 = vst [vmem:[#allocation2] sm:$0xff] %v176
    %179 = vst [vmem:[#allocation2 + $0x8] sm:$0xff] %v177
    // Predicated region
    $region42: #{tpu_custom_call.1} parent=1 // pred_check
      %p180 = pneg %p84
    $region43: #{tpu_custom_call.1} parent=1 // pred_check_branch
      %182 = sbr.rel (%p180) target = $region45
    $region44: #{tpu_custom_call.1} parent=1 // pred_region
      %v183 = vld [vmem:[#allocation2] sm:$0xff]
      %v184 = vld [vmem:[#allocation2 + $0x8] sm:$0xff]
      %v185 = vld [vmem:[%s4] sm:$0x1]
      %v187 = vperm.slane %v185, 0
      %v189 = vadd.f32 %v183, %v187
      %v190 = vadd.f32 %v184, %v187
      %191 = vst [vmem:[#allocation11] sm:$0xff] %v189
      %192 = vst [vmem:[#allocation11 + $0x8] sm:$0xff] %v190
    $region45: #{tpu_custom_call.1} parent=1 // pred_fallthru
      _
    // Predicated region
    $region46: #{tpu_custom_call.1} parent=1 // pred_check
      _
    $region47: #{tpu_custom_call.1} parent=1 // pred_check_branch
      %194 = sbr.rel (0) target = $region49
    $region48: #{tpu_custom_call.1} parent=1 // pred_region
      %196 = vsyncadd [#allocation5], 0
      %s197 = sshll.u32 [#allocation11], 4
      %s198 = int_to_ptr.vmem [resolvable:$true] %s197
      %s199 = sshll.u32 %s5, 4
      %s200 = int_to_ptr.hbm [resolvable:$true] %s199
      %205 = dma.vmem_to_hbm [thread:$0]  %s198, 256, %s200, [#allocation5], 128, 128, 8
    $region49: #{tpu_custom_call.1} parent=1 // pred_fallthru
      _
    // Predicated region
    $region50: #{tpu_custom_call.1} parent=1 // pred_check
      _
    $region51: #{tpu_custom_call.1} parent=1 // pred_check_branch
      %207 = sbr.rel (0) target = $region53
    $region52: #{tpu_custom_call.1} parent=1 // pred_region
      %209 = dma.done [#allocation5], 256
    $region53: #{tpu_custom_call.1} parent=1 // pred_fallthru
      _
    %210 = vsyncpa [#allocation4], 1
    %211 = vsyncpa [#allocation7], 1
    %212 = vsyncpa [#allocation10], 1
    %213 = vsyncpa [#allocation5], 1

</llo_original>
